<compile_context>
chip_gen: v6e
topology: v6e:2x2x1
jax: 0.10.0
libtpu: 0.0.40
codegen_flags: <defaults>
</compile_context>

<pallas_src>
import jax
import jax.numpy as jnp
from jax.experimental import pallas as pl
from jax.experimental.pallas import tpu as pltpu

# ----------------------------- model config ---------------------------------
N_INST = 8            # number of instances in the "bag" (dim 0 of x)
C, HS, WS = 2, 8, 8   # per-instance feature map -> in_size = 2*8*8 = 128
F_IN = C * HS * WS    # in_size (flattened), lane-dense (128)
D_MODEL = 256         # d_model default of the module
D_OUT = 32            # out_size


# ------------------------------- kernel -------------------------------------
def attention_merge_kernel(
    x2_ref,                 # (N, F)       flattened input
    wv_ref, bv_ref,         # (F, D), (1, D)      att_v linear
    wa_ref, ba_ref,         # (D, 1), (1, 1)      att linear
    wo1_ref, bo1_ref,       # (F, D), (1, D)      out linear 1
    wo2_ref, bo2_ref,       # (D, OUT), (1, OUT)  out linear 2
    o_ref,                  # (1, OUT)
):
    x2 = x2_ref[...]                                                      # (N, F)

    # ---- att_v: Linear(F -> d_model) + ReLU ----
    v = jnp.dot(x2, wv_ref[...], preferred_element_type=jnp.float32) + bv_ref[...]
    v = jnp.maximum(v, 0.0)                                               # (N, D)

    # forward() reuses att_v for u, so the gate is simply v * v
    gate = v * v

    # ---- att: Linear(d_model -> 1) + Softmax over dim 0 ----
    logits = jnp.dot(gate, wa_ref[...], preferred_element_type=jnp.float32) + ba_ref[...]  # (N, 1)
    m = jnp.max(logits, axis=0, keepdims=True)                            # (1, 1)
    e = jnp.exp(logits - m)                                               # (N, 1)
    denom = jnp.sum(e, axis=0, keepdims=True)                             # (1, 1) scalar
    weight = e * pl.reciprocal(denom, approx=False)                       # (N, 1)

    # ---- pooled = weight^T @ x2, as broadcast-multiply + sublane reduce ----
    pooled = jnp.sum(weight * x2, axis=0, keepdims=True)                  # (1, F)

    # ---- out head: Linear + ReLU + (Dropout=identity) + Linear + Sigmoid ----
    h = jnp.dot(pooled, wo1_ref[...], preferred_element_type=jnp.float32) + bo1_ref[...]
    h = jnp.maximum(h, 0.0)                                               # (1, D)
    y = jnp.dot(h, wo2_ref[...], preferred_element_type=jnp.float32) + bo2_ref[...]
    o_ref[...] = (1.0 / (1.0 + jnp.exp(-y))).astype(o_ref.dtype)          # sigmoid


# ------------------------------- wrapper -------------------------------------
def attention_merge_forward(x, params):
    wv, bv, wa, ba, wo1, bo1, wo2, bo2 = params
    n = x.shape[0]
    x2 = x.reshape(n, -1)                    # torch.flatten(x, 1)
    out_size = wo2.shape[1]

    full = lambda a: pl.BlockSpec(a.shape, lambda i, _ndim=a.ndim: (0,) * _ndim)

    return pl.pallas_call(
        attention_merge_kernel,
        out_shape=jax.ShapeDtypeStruct((1, out_size), x.dtype),
        grid_spec=pltpu.PrefetchScalarGridSpec(
            num_scalar_prefetch=0,
            grid=(1,),                       # single fused step: everything fits in VMEM
            in_specs=[
                full(x2),
                full(wv), full(bv),
                full(wa), full(ba),
                full(wo1), full(bo1),
                full(wo2), full(bo2),
            ],
            out_specs=pl.BlockSpec((1, out_size), lambda i: (0, 0)),
        ),
        compiler_params=pltpu.CompilerParams(
            dimension_semantics=("arbitrary",)
        ),
    )(x2, wv, bv, wa, ba, wo1, bo1, wo2, bo2)


# --------------------------- plain-JAX reference ------------------------------
def reference_forward(x, params):
    wv, bv, wa, ba, wo1, bo1, wo2, bo2 = params
    x2 = x.reshape(x.shape[0], -1)
    v = jnp.maximum(x2 @ wv + bv, 0.0)
    u = v                                      # forward reuses att_v -> u == v
    logits = (v * u) @ wa + ba                 # (N, 1)
    weight = jax.nn.softmax(logits, axis=0)    # softmax over dim 0
    pooled = weight.T @ x2                     # (1, F)
    h = jnp.maximum(pooled @ wo1 + bo1, 0.0)
    return jax.nn.sigmoid(h @ wo2 + bo2)       # (1, out_size)


# --------------------------------- main ---------------------------------------
if __name__ == "__main__":
    key = jax.random.PRNGKey(0)
    keys = jax.random.split(key, 10)

    x = jax.random.normal(keys[0], (N_INST, C, HS, WS), dtype=jnp.float32)

    sc = 0.1
    # weights stored as (in, out), i.e. transposed relative to torch's (out, in)
    wv  = sc * jax.random.normal(keys[1], (F_IN, D_MODEL), jnp.float32)
    bv  = sc * jax.random.normal(keys[2], (1, D_MODEL), jnp.float32)
    wa  = sc * jax.random.normal(keys[3], (D_MODEL, 1), jnp.float32)
    ba  = sc * jax.random.normal(keys[4], (1, 1), jnp.float32)
    wo1 = sc * jax.random.normal(keys[5], (F_IN, D_MODEL), jnp.float32)
    bo1 = sc * jax.random.normal(keys[6], (1, D_MODEL), jnp.float32)
    wo2 = sc * jax.random.normal(keys[7], (D_MODEL, D_OUT), jnp.float32)
    bo2 = sc * jax.random.normal(keys[8], (1, D_OUT), jnp.float32)

    params = (wv, bv, wa, ba, wo1, bo1, wo2, bo2)

    out = attention_merge_forward(x, params)
    out = jax.block_until_ready(out)

    ref = reference_forward(x, params)
    assert out.shape == (1, D_OUT)
    assert jnp.allclose(out, ref, atol=1e-4, rtol=1e-4), "mismatch vs reference"

    print("KERNEL_OK")
</pallas_src>

<mosaic_0001>
module attributes {stable_mosaic.version = 11 : i64} {
  func.func @attention_merge_kernel(%arg0: i32, %arg1: memref<8x128xf32, #tpu.memory_space<vmem>>, %arg2: memref<128x256xf32, #tpu.memory_space<vmem>>, %arg3: memref<1x256xf32, #tpu.memory_space<vmem>>, %arg4: memref<256x1xf32, #tpu.memory_space<vmem>>, %arg5: memref<1x1xf32, #tpu.memory_space<vmem>>, %arg6: memref<128x256xf32, #tpu.memory_space<vmem>>, %arg7: memref<1x256xf32, #tpu.memory_space<vmem>>, %arg8: memref<256x32xf32, #tpu.memory_space<vmem>>, %arg9: memref<1x32xf32, #tpu.memory_space<vmem>>, %arg10: memref<1x32xf32, #tpu.memory_space<vmem>>) attributes {dimension_semantics = [#tpu.dimension_semantics<arbitrary>], iteration_bounds = array<i64: 1>, scalar_prefetch = 0 : i64, scratch_operands = 0 : i64, tpu.core_type = #tpu.core_type<tc>, window_params = [{pipeline_mode = #tpu.pipeline_mode<synchronous>, transform_indices = @transform_0, window_bounds = array<i64: 8, 128>}, {pipeline_mode = #tpu.pipeline_mode<synchronous>, transform_indices = @transform_1, window_bounds = array<i64: 128, 256>}, {pipeline_mode = #tpu.pipeline_mode<synchronous>, transform_indices = @transform_2, window_bounds = array<i64: 1, 256>}, {pipeline_mode = #tpu.pipeline_mode<synchronous>, transform_indices = @transform_3, window_bounds = array<i64: 256, 1>}, {pipeline_mode = #tpu.pipeline_mode<synchronous>, transform_indices = @transform_4, window_bounds = array<i64: 1, 1>}, {pipeline_mode = #tpu.pipeline_mode<synchronous>, transform_indices = @transform_5, window_bounds = array<i64: 128, 256>}, {pipeline_mode = #tpu.pipeline_mode<synchronous>, transform_indices = @transform_6, window_bounds = array<i64: 1, 256>}, {pipeline_mode = #tpu.pipeline_mode<synchronous>, transform_indices = @transform_7, window_bounds = array<i64: 256, 32>}, {pipeline_mode = #tpu.pipeline_mode<synchronous>, transform_indices = @transform_8, window_bounds = array<i64: 1, 32>}, {pipeline_mode = #tpu.pipeline_mode<synchronous>, transform_indices = @transform_9, window_bounds = array<i64: 1, 32>}]} {
    %c0 = arith.constant 0 : index
    %c0_0 = arith.constant 0 : index
    %0 = vector.load %arg1[%c0, %c0_0] : memref<8x128xf32, #tpu.memory_space<vmem>>, vector<8x128xf32>
    %c0_1 = arith.constant 0 : index
    %c0_2 = arith.constant 0 : index
    %1 = vector.load %arg2[%c0_1, %c0_2] : memref<128x256xf32, #tpu.memory_space<vmem>>, vector<128x256xf32>
    %cst = arith.constant dense<0.000000e+00> : vector<8x256xf32>
    %2 = tpu.matmul %0, %1, %cst {dimension_numbers = #tpu.dot_dimension_numbers<[1], [0], [0], [1], [0, 0, 1, 1], [], []>} : vector<8x128xf32>, vector<128x256xf32>, vector<8x256xf32> -> vector<8x256xf32>
    %c0_3 = arith.constant 0 : index
    %c0_4 = arith.constant 0 : index
    %3 = vector.load %arg3[%c0_3, %c0_4] : memref<1x256xf32, #tpu.memory_space<vmem>>, vector<1x256xf32>
    %4 = vector.broadcast %3 : vector<1x256xf32> to vector<8x256xf32>
    %5 = arith.addf %2, %4 : vector<8x256xf32>
    %cst_5 = arith.constant 0.000000e+00 : f32
    %6 = vector.broadcast %cst_5 : f32 to vector<8x256xf32>
    %7 = arith.maximumf %5, %6 : vector<8x256xf32>
    %8 = arith.mulf %7, %7 : vector<8x256xf32>
    %c0_6 = arith.constant 0 : index
    %c0_7 = arith.constant 0 : index
    %9 = vector.load %arg4[%c0_6, %c0_7] : memref<256x1xf32, #tpu.memory_space<vmem>>, vector<256x1xf32>
    %cst_8 = arith.constant dense<0.000000e+00> : vector<8x1xf32>
    %10 = tpu.matmul %8, %9, %cst_8 {dimension_numbers = #tpu.dot_dimension_numbers<[1], [0], [0], [1], [0, 0, 1, 1], [], []>} : vector<8x256xf32>, vector<256x1xf32>, vector<8x1xf32> -> vector<8x1xf32>
    %c0_9 = arith.constant 0 : index
    %c0_10 = arith.constant 0 : index
    %11 = vector.load %arg5[%c0_9, %c0_10] : memref<1x1xf32, #tpu.memory_space<vmem>>, vector<1x1xf32>
    %12 = vector.broadcast %11 : vector<1x1xf32> to vector<8x1xf32>
    %13 = arith.addf %10, %12 : vector<8x1xf32>
    %cst_11 = arith.constant dense<0xFF800000> : vector<1xf32>
    %14 = vector.multi_reduction <maximumf>, %13, %cst_11 [0] : vector<8x1xf32> to vector<1xf32>
    %15 = vector.shape_cast %14 : vector<1xf32> to vector<1x1xf32>
    %16 = vector.broadcast %15 : vector<1x1xf32> to vector<8x1xf32>
    %17 = arith.subf %13, %16 : vector<8x1xf32>
    %18 = math.exp %17 : vector<8x1xf32>
    %cst_12 = arith.constant dense<0.000000e+00> : vector<1xf32>
    %19 = vector.multi_reduction <add>, %18, %cst_12 [0] : vector<8x1xf32> to vector<1xf32>
    %20 = vector.shape_cast %19 : vector<1xf32> to vector<1x1xf32>
    %21 = tpu.reciprocal %20 : vector<1x1xf32> -> vector<1x1xf32>
    %22 = vector.broadcast %21 : vector<1x1xf32> to vector<8x1xf32>
    %23 = arith.mulf %18, %22 : vector<8x1xf32>
    %24 = vector.broadcast %23 : vector<8x1xf32> to vector<8x128xf32>
    %25 = arith.mulf %24, %0 : vector<8x128xf32>
    %cst_13 = arith.constant dense<0.000000e+00> : vector<128xf32>
    %26 = vector.multi_reduction <add>, %25, %cst_13 [0] : vector<8x128xf32> to vector<128xf32>
    %27 = vector.shape_cast %26 : vector<128xf32> to vector<1x128xf32>
    %c0_14 = arith.constant 0 : index
    %c0_15 = arith.constant 0 : index
    %28 = vector.load %arg6[%c0_14, %c0_15] : memref<128x256xf32, #tpu.memory_space<vmem>>, vector<128x256xf32>
    %cst_16 = arith.constant dense<0.000000e+00> : vector<1x256xf32>
    %29 = tpu.matmul %27, %28, %cst_16 {dimension_numbers = #tpu.dot_dimension_numbers<[1], [0], [0], [1], [0, 0, 1, 1], [], []>} : vector<1x128xf32>, vector<128x256xf32>, vector<1x256xf32> -> vector<1x256xf32>
    %c0_17 = arith.constant 0 : index
    %c0_18 = arith.constant 0 : index
    %30 = vector.load %arg7[%c0_17, %c0_18] : memref<1x256xf32, #tpu.memory_space<vmem>>, vector<1x256xf32>
    %31 = arith.addf %29, %30 : vector<1x256xf32>
    %cst_19 = arith.constant 0.000000e+00 : f32
    %32 = vector.broadcast %cst_19 : f32 to vector<1x256xf32>
    %33 = arith.maximumf %31, %32 : vector<1x256xf32>
    %c0_20 = arith.constant 0 : index
    %c0_21 = arith.constant 0 : index
    %34 = vector.load %arg8[%c0_20, %c0_21] : memref<256x32xf32, #tpu.memory_space<vmem>>, vector<256x32xf32>
    %cst_22 = arith.constant dense<0.000000e+00> : vector<1x32xf32>
    %35 = tpu.matmul %33, %34, %cst_22 {dimension_numbers = #tpu.dot_dimension_numbers<[1], [0], [0], [1], [0, 0, 1, 1], [], []>} : vector<1x256xf32>, vector<256x32xf32>, vector<1x32xf32> -> vector<1x32xf32>
    %c0_23 = arith.constant 0 : index
    %c0_24 = arith.constant 0 : index
    %36 = vector.load %arg9[%c0_23, %c0_24] : memref<1x32xf32, #tpu.memory_space<vmem>>, vector<1x32xf32>
    %37 = arith.addf %35, %36 : vector<1x32xf32>
    %cst_25 = arith.constant 0.000000e+00 : f32
    %38 = vector.broadcast %cst_25 : f32 to vector<1x32xf32>
    %39 = arith.subf %38, %37 : vector<1x32xf32>
    %40 = math.exp %39 : vector<1x32xf32>
    %cst_26 = arith.constant 1.000000e+00 : f32
    %41 = vector.broadcast %cst_26 : f32 to vector<1x32xf32>
    %42 = arith.addf %41, %40 : vector<1x32xf32>
    %cst_27 = arith.constant 1.000000e+00 : f32
    %43 = vector.broadcast %cst_27 : f32 to vector<1x32xf32>
    %44 = arith.divf %43, %42 : vector<1x32xf32>
    %c0_28 = arith.constant 0 : index
    %c0_29 = arith.constant 0 : index
    %45 = vector.load %arg10[%c0_28, %c0_29] : memref<1x32xf32, #tpu.memory_space<vmem>>, vector<1x32xf32>
    tpu.vector_store %arg10[%c0_28, %c0_29], %44 {strides = array<i32>} : memref<1x32xf32, #tpu.memory_space<vmem>>, vector<1x32xf32>,
    return
  }
  func.func @transform_0(%arg0: i32) -> (i32, i32) {
    %c0_i32 = arith.constant 0 : i32
    %c0_i32_0 = arith.constant 0 : i32
    %c0_i32_1 = arith.constant 0 : i32
    return %c0_i32, %c0_i32_0 : i32, i32
  }
  func.func @transform_1(%arg0: i32) -> (i32, i32) {
    %c0_i32 = arith.constant 0 : i32
    %c0_i32_0 = arith.constant 0 : i32
    %c0_i32_1 = arith.constant 0 : i32
    return %c0_i32, %c0_i32_0 : i32, i32
  }
  func.func @transform_2(%arg0: i32) -> (i32, i32) {
    %c0_i32 = arith.constant 0 : i32
    %c0_i32_0 = arith.constant 0 : i32
    %c0_i32_1 = arith.constant 0 : i32
    return %c0_i32, %c0_i32_0 : i32, i32
  }
  func.func @transform_3(%arg0: i32) -> (i32, i32) {
    %c0_i32 = arith.constant 0 : i32
    %c0_i32_0 = arith.constant 0 : i32
    %c0_i32_1 = arith.constant 0 : i32
    return %c0_i32, %c0_i32_0 : i32, i32
  }
  func.func @transform_4(%arg0: i32) -> (i32, i32) {
    %c0_i32 = arith.constant 0 : i32
    %c0_i32_0 = arith.constant 0 : i32
    %c0_i32_1 = arith.constant 0 : i32
    return %c0_i32, %c0_i32_0 : i32, i32
  }
  func.func @transform_5(%arg0: i32) -> (i32, i32) {
    %c0_i32 = arith.constant 0 : i32
    %c0_i32_0 = arith.constant 0 : i32
    %c0_i32_1 = arith.constant 0 : i32
    return %c0_i32, %c0_i32_0 : i32, i32
  }
  func.func @transform_6(%arg0: i32) -> (i32, i32) {
    %c0_i32 = arith.constant 0 : i32
    %c0_i32_0 = arith.constant 0 : i32
    %c0_i32_1 = arith.constant 0 : i32
    return %c0_i32, %c0_i32_0 : i32, i32
  }
  func.func @transform_7(%arg0: i32) -> (i32, i32) {
    %c0_i32 = arith.constant 0 : i32
    %c0_i32_0 = arith.constant 0 : i32
    %c0_i32_1 = arith.constant 0 : i32
    return %c0_i32, %c0_i32_0 : i32, i32
  }
  func.func @transform_8(%arg0: i32) -> (i32, i32) {
    %c0_i32 = arith.constant 0 : i32
    %c0_i32_0 = arith.constant 0 : i32
    %c0_i32_1 = arith.constant 0 : i32
    return %c0_i32, %c0_i32_0 : i32, i32
  }
  func.func @transform_9(%arg0: i32) -> (i32, i32) {
    %c0_i32 = arith.constant 0 : i32
    %c0_i32_0 = arith.constant 0 : i32
    %c0_i32_1 = arith.constant 0 : i32
    return %c0_i32, %c0_i32_0 : i32, i32
  }
}

</mosaic_0001>

<llo_original>
// kernel: tpu_custom_call.1
$region0: #{tpu_custom_call.1}
  #allocation0 [shape = 'u32[]', space=smem, size = 0x4, offset = 0x4, fixed_abs, tag = 'smem constant byte address 0x4 - core index']
  #allocation1 [shape = 'u32[144,128]{1,0:T(1,128)}', space=vmem, size = 0x12000, scoped, tag = 'internal scratch']
  #allocation2 [shape = 'f32[1,1]{1,0:T(1,128)S(1)}', space=vmem, size = 0x200, scoped, tag = 'scoped memory for tpu_custom_call.1']
  %s0 = inlined_call_operand.hbm [shape: f32[8,128], index: 0, kind: input, shape index: {}]
  %s1 = inlined_call_operand.vmem [shape: f32[128,256], index: 1, kind: input, shape index: {}]
  %s2 = inlined_call_operand.vmem [shape: f32[1,256], index: 2, kind: input, shape index: {}]
  %s3 = inlined_call_operand.vmem [shape: f32[256,1], index: 3, kind: input, shape index: {}]
  %s4 = inlined_call_operand.<no memory space> [shape: f32[1,1], index: 4, kind: input, shape index: {}]
  %s5 = inlined_call_operand.vmem [shape: f32[128,256], index: 5, kind: input, shape index: {}]
  %s6 = inlined_call_operand.vmem [shape: f32[1,256], index: 6, kind: input, shape index: {}]
  %s7 = inlined_call_operand.vmem [shape: f32[256,32], index: 7, kind: input, shape index: {}]
  %s8 = inlined_call_operand.vmem [shape: f32[1,32], index: 8, kind: input, shape index: {}]
  %s9 = inlined_call_operand.hbm [shape: f32[1,32], index: 9, kind: output, shape index: {}]
  %s10 = sld [smem:[#allocation0]]
  $region50: #{tpu_custom_call.1} parent=0
    _
  %s12 = ssub.s32 1, %s10
  %s13 = scalar_select 0, %s12, %s10
  %v14 = vstv %s4
  %15 = vst [vmem:[#allocation2] sm:$0x1] %v14
  $region1: #{tpu_custom_call.1} parent=0
    #allocation3 [shape = 'u8[4096]{0}', space=vmem, size = 0x1000, scoped, tag = 'input window, operand 0, single buffered']
    #allocation4 [shape = 's32[1]{0}', space=sflag, size = 0x4, scoped, tag = 'scoped memory for tpu_custom_call.1']
    #allocation5 [shape = 's32[1]{0}', space=sflag, size = 0x4, scoped, tag = 'scoped memory for tpu_custom_call.1']
    #allocation6 [shape = 'u8[512]{0}', space=vmem, size = 0x400, scoped, tag = 'output window, operand 0, single buffered']
    %16 = vsyncpa [#allocation4], 0
    %17 = vsyncpa [#allocation5], 0
    // Predicated region
    $region2: #{tpu_custom_call.1} parent=1 // pred_check
      _
    $region3: #{tpu_custom_call.1} parent=1 // pred_check_branch
      %19 = sbr.rel (0) target = $region5
    $region4: #{tpu_custom_call.1} parent=1 // pred_region
      %s21 = ssub.s32 128, 128
      %22 = vsyncadd [#allocation4], %s21
      %s24 = sshll.u32 [#allocation3], 4
      %s25 = int_to_ptr.vmem [resolvable:$true] %s24
      %27 = dma.hbm_to_vmem [thread:$0]  %s0, 128, %s25, [#allocation4]
    $region5: #{tpu_custom_call.1} parent=1 // pred_fallthru
      _
    // Predicated region
    $region6: #{tpu_custom_call.1} parent=1 // pred_check
      _
    $region7: #{tpu_custom_call.1} parent=1 // pred_check_branch
      %29 = sbr.rel (0) target = $region9
    $region8: #{tpu_custom_call.1} parent=1 // pred_region
      _
    $region9: #{tpu_custom_call.1} parent=1 // pred_fallthru
      _
    // Predicated region
    $region10: #{tpu_custom_call.1} parent=1 // pred_check
      _
    $region11: #{tpu_custom_call.1} parent=1 // pred_check_branch
      %31 = sbr.rel (0) target = $region13
    $region12: #{tpu_custom_call.1} parent=1 // pred_region
      _
    $region13: #{tpu_custom_call.1} parent=1 // pred_fallthru
      _
    // Predicated region
    $region14: #{tpu_custom_call.1} parent=1 // pred_check
      _
    $region15: #{tpu_custom_call.1} parent=1 // pred_check_branch
      %33 = sbr.rel (0) target = $region17
    $region16: #{tpu_custom_call.1} parent=1 // pred_region
      _
    $region17: #{tpu_custom_call.1} parent=1 // pred_fallthru
      _
    // Predicated region
    $region18: #{tpu_custom_call.1} parent=1 // pred_check
      _
    $region19: #{tpu_custom_call.1} parent=1 // pred_check_branch
      %35 = sbr.rel (0) target = $region21
    $region20: #{tpu_custom_call.1} parent=1 // pred_region
      _
    $region21: #{tpu_custom_call.1} parent=1 // pred_fallthru
      _
    // Predicated region
    $region22: #{tpu_custom_call.1} parent=1 // pred_check
      _
    $region23: #{tpu_custom_call.1} parent=1 // pred_check_branch
      %37 = sbr.rel (0) target = $region25
    $region24: #{tpu_custom_call.1} parent=1 // pred_region
      _
    $region25: #{tpu_custom_call.1} parent=1 // pred_fallthru
      _
    // Predicated region
    $region26: #{tpu_custom_call.1} parent=1 // pred_check
      _
    $region27: #{tpu_custom_call.1} parent=1 // pred_check_branch
      %39 = sbr.rel (0) target = $region29
    $region28: #{tpu_custom_call.1} parent=1 // pred_region
      _
    $region29: #{tpu_custom_call.1} parent=1 // pred_fallthru
      _
    // Predicated region
    $region30: #{tpu_custom_call.1} parent=1 // pred_check
      _
    $region31: #{tpu_custom_call.1} parent=1 // pred_check_branch
      %41 = sbr.rel (0) target = $region33
    $region32: #{tpu_custom_call.1} parent=1 // pred_region
      _
    $region33: #{tpu_custom_call.1} parent=1 // pred_fallthru
      _
    // Predicated region
    $region34: #{tpu_custom_call.1} parent=1 // pred_check
      _
    $region35: #{tpu_custom_call.1} parent=1 // pred_check_branch
      %43 = sbr.rel (0) target = $region37
    $region36: #{tpu_custom_call.1} parent=1 // pred_region
      _
    $region37: #{tpu_custom_call.1} parent=1 // pred_fallthru
      _
    // Predicated region
    $region38: #{tpu_custom_call.1} parent=1 // pred_check
      _
    $region39: #{tpu_custom_call.1} parent=1 // pred_check_branch
      %45 = sbr.rel (0) target = $region41
    $region40: #{tpu_custom_call.1} parent=1 // pred_region
      %46 = dma.done [#allocation4], 128
    $region41: #{tpu_custom_call.1} parent=1 // pred_fallthru
      _
    %v47 = vld [vmem:[#allocation3] sm:$0xff]
    %v48 = vld [vmem:[%s1] sm:$0xff]
    %v49 = vld [vmem:[%s1 + $0x8] sm:$0xff]
    %v50 = vld [vmem:[%s1 + $0x10] sm:$0xff]
    %v51 = vld [vmem:[%s1 + $0x18] sm:$0xff]
    %v52 = vld [vmem:[%s1 + $0x20] sm:$0xff]
    %v53 = vld [vmem:[%s1 + $0x28] sm:$0xff]
    %v54 = vld [vmem:[%s1 + $0x30] sm:$0xff]
    %v55 = vld [vmem:[%s1 + $0x38] sm:$0xff]
    %v56 = vld [vmem:[%s1 + $0x40] sm:$0xff]
    %v57 = vld [vmem:[%s1 + $0x48] sm:$0xff]
    %v58 = vld [vmem:[%s1 + $0x50] sm:$0xff]
    %v59 = vld [vmem:[%s1 + $0x58] sm:$0xff]
    %v60 = vld [vmem:[%s1 + $0x60] sm:$0xff]
    %v61 = vld [vmem:[%s1 + $0x68] sm:$0xff]
    %v62 = vld [vmem:[%s1 + $0x70] sm:$0xff]
    %v63 = vld [vmem:[%s1 + $0x78] sm:$0xff]
    %v64 = vld [vmem:[%s1 + $0x80] sm:$0xff]
    %v65 = vld [vmem:[%s1 + $0x88] sm:$0xff]
    %v66 = vld [vmem:[%s1 + $0x90] sm:$0xff]
    %v67 = vld [vmem:[%s1 + $0x98] sm:$0xff]
    %v68 = vld [vmem:[%s1 + $0xa0] sm:$0xff]
    %v69 = vld [vmem:[%s1 + $0xa8] sm:$0xff]
    %v70 = vld [vmem:[%s1 + $0xb0] sm:$0xff]
    %v71 = vld [vmem:[%s1 + $0xb8] sm:$0xff]
    %v72 = vld [vmem:[%s1 + $0xc0] sm:$0xff]
    %v73 = vld [vmem:[%s1 + $0xc8] sm:$0xff]
    %v74 = vld [vmem:[%s1 + $0xd0] sm:$0xff]
    %v75 = vld [vmem:[%s1 + $0xd8] sm:$0xff]
    %v76 = vld [vmem:[%s1 + $0xe0] sm:$0xff]
    %v77 = vld [vmem:[%s1 + $0xe8] sm:$0xff]
    %v78 = vld [vmem:[%s1 + $0xf0] sm:$0xff]
    %v79 = vld [vmem:[%s1 + $0xf8] sm:$0xff]
    %v80 = vld [vmem:[%s2] sm:$0x3]
    %v82 = vlaneseq
    %v83 = vshrl.u32 %v82, 7
    %v84 = vsub.s32 0, %v83
    %v85 = vrot.slane %v80, %v84
    %v86 = vlaneseq
    %v87 = vshrl.u32 %v86, 7
    %v88 = vsub.s32 1, %v87
    %v89 = vrot.slane %v80, %v88
    %92 = vmatprep.subr.mxu0 %v79
    %93 = vmatpush1.msra.mxu0 %v78
    %94 = vmatprep.subr.mxu0 %v77
    %95 = vmatpush1.msra.mxu0 %v76
    %96 = vmatprep.subr.mxu0 %v75
    %97 = vmatpush1.msra.mxu0 %v74
    %98 = vmatprep.subr.mxu0 %v73
    %99 = vmatpush1.msra.mxu0 %v72
    %100 = vmatprep.subr.mxu0 %v71
    %101 = vmatpush1.msra.mxu0 %v70
    %102 = vmatprep.subr.mxu0 %v69
    %103 = vmatpush1.msra.mxu0 %v68
    %104 = vmatprep.subr.mxu0 %v67
    %105 = vmatpush1.msra.mxu0 %v66
    %106 = vmatprep.subr.mxu0 %v65
    %107 = vmatpush1.msra.mxu0 %v64
    %108 = vmatprep.subr.mxu0 %v63
    %109 = vmatpush1.msra.mxu0 %v62
    %110 = vmatprep.subr.mxu0 %v61
    %111 = vmatpush1.msra.mxu0 %v60
    %112 = vmatprep.subr.mxu0 %v59
    %113 = vmatpush1.msra.mxu0 %v58
    %114 = vmatprep.subr.mxu0 %v57
    %115 = vmatpush1.msra.mxu0 %v56
    %116 = vmatprep.subr.mxu0 %v55
    %117 = vmatpush1.msra.mxu0 %v54
    %118 = vmatprep.subr.mxu0 %v53
    %119 = vmatpush1.msra.mxu0 %v52
    %120 = vmatprep.subr.mxu0 %v51
    %121 = vmatpush1.msra.mxu0 %v50
    %122 = vmatprep.subr.mxu0 %v49
    %123 = vmatpush1.msra.mxu0 %v48
    %124 = vmatprep.subr.mxu0 0.0
    %125 = vmatpush2.msra.mxu0 0.0
    %126 = vmatprep.subr.mxu0 0.0
    %127 = vmatpush2.msra.mxu0 0.0
    %128 = vmatprep.subr.mxu0 0.0
    %129 = vmatpush2.msra.mxu0 0.0
    %130 = vmatprep.subr.mxu0 0.0
    %131 = vmatpush2.msra.mxu0 0.0
    %132 = vmatprep.subr.mxu0 0.0
    %133 = vmatpush2.msra.mxu0 0.0
    %134 = vmatprep.subr.mxu0 0.0
    %135 = vmatpush2.msra.mxu0 0.0
    %136 = vmatprep.subr.mxu0 0.0
    %137 = vmatpush2.msra.mxu0 0.0
    %138 = vmatprep.subr.mxu0 0.0
    %139 = vmatpush2.msra.mxu0 0.0
    %140 = vmatprep.subr.mxu0 0.0
    %141 = vmatpush2.msra.mxu0 0.0
    %142 = vmatprep.subr.mxu0 0.0
    %143 = vmatpush2.msra.mxu0 0.0
    %144 = vmatprep.subr.mxu0 0.0
    %145 = vmatpush2.msra.mxu0 0.0
    %146 = vmatprep.subr.mxu0 0.0
    %147 = vmatpush2.msra.mxu0 0.0
    %148 = vmatprep.subr.mxu0 0.0
    %149 = vmatpush2.msra.mxu0 0.0
    %150 = vmatprep.subr.mxu0 0.0
    %151 = vmatpush2.msra.mxu0 0.0
    %152 = vmatprep.subr.mxu0 0.0
    %153 = vmatpush2.msra.mxu0 0.0
    %154 = vmatprep.subr.mxu0 0.0
    %155 = vmatpush2.msra.mxu0 0.0
    %156 = vmatprep.mubr.f32.mxu0 0.0
    %157 = vmatmul.mubr.f32.gmra.mxu0 %v47
    %v158 = vpop.f32.mrf.mxu0
    %v159 = vadd.f32 %v85, %v158
    %v160 = vpop.f32.mrf.mxu0
    %v161 = vadd.f32 %v89, %v160
    %162 = vdwg.mxu0
    %v163 = vmax.f32 %v159, 0.0
    %v164 = vmax.f32 %v161, 0.0
    %v165 = vmul.f32 %v163, %v163
    %v166 = vmul.f32 %v164, %v164
    %v167 = vld [vmem:[%s3] sm:$0xff]
    %v168 = vld [vmem:[%s3 + $0x8] sm:$0xff]
    %v169 = vld [vmem:[%s3 + $0x10] sm:$0xff]
    %v170 = vld [vmem:[%s3 + $0x18] sm:$0xff]
    %v171 = vld [vmem:[%s3 + $0x20] sm:$0xff]
    %v172 = vld [vmem:[%s3 + $0x28] sm:$0xff]
    %v173 = vld [vmem:[%s3 + $0x30] sm:$0xff]
    %v174 = vld [vmem:[%s3 + $0x38] sm:$0xff]
    %v175 = vld [vmem:[%s3 + $0x40] sm:$0xff]
    %v176 = vld [vmem:[%s3 + $0x48] sm:$0xff]
    %v177 = vld [vmem:[%s3 + $0x50] sm:$0xff]
    %v178 = vld [vmem:[%s3 + $0x58] sm:$0xff]
    %v179 = vld [vmem:[%s3 + $0x60] sm:$0xff]
    %v180 = vld [vmem:[%s3 + $0x68] sm:$0xff]
    %v181 = vld [vmem:[%s3 + $0x70] sm:$0xff]
    %v182 = vld [vmem:[%s3 + $0x78] sm:$0xff]
    %v183 = vld [vmem:[%s3 + $0x80] sm:$0xff]
    %v184 = vld [vmem:[%s3 + $0x88] sm:$0xff]
    %v185 = vld [vmem:[%s3 + $0x90] sm:$0xff]
    %v186 = vld [vmem:[%s3 + $0x98] sm:$0xff]
    %v187 = vld [vmem:[%s3 + $0xa0] sm:$0xff]
    %v188 = vld [vmem:[%s3 + $0xa8] sm:$0xff]
    %v189 = vld [vmem:[%s3 + $0xb0] sm:$0xff]
    %v190 = vld [vmem:[%s3 + $0xb8] sm:$0xff]
    %v191 = vld [vmem:[%s3 + $0xc0] sm:$0xff]
    %v192 = vld [vmem:[%s3 + $0xc8] sm:$0xff]
    %v193 = vld [vmem:[%s3 + $0xd0] sm:$0xff]
    %v194 = vld [vmem:[%s3 + $0xd8] sm:$0xff]
    %v195 = vld [vmem:[%s3 + $0xe0] sm:$0xff]
    %v196 = vld [vmem:[%s3 + $0xe8] sm:$0xff]
    %v197 = vld [vmem:[%s3 + $0xf0] sm:$0xff]
    %v198 = vld [vmem:[%s3 + $0xf8] sm:$0xff]
    %v199 = vld [vmem:[#allocation2] sm:$0x1]
    %v201 = vlaneseq
    %v202 = vshrl.u32 %v201, 7
    %v203 = vsub.s32 0, %v202
    %v204 = vrot.slane %v199, %v203
    %206 = vmatprep.subr.mxu0 0.0
    %207 = vmatpush1.msra.mxu0 %v182
    %208 = vmatprep.subr.mxu0 0.0
    %209 = vmatpush1.msra.mxu0 %v181
    %210 = vmatprep.subr.mxu0 0.0
    %211 = vmatpush1.msra.mxu0 %v180
    %212 = vmatprep.subr.mxu0 0.0
    %213 = vmatpush1.msra.mxu0 %v179
    %214 = vmatprep.subr.mxu0 0.0
    %215 = vmatpush1.msra.mxu0 %v178
    %216 = vmatprep.subr.mxu0 0.0
    %217 = vmatpush1.msra.mxu0 %v177
    %218 = vmatprep.subr.mxu0 0.0
    %219 = vmatpush1.msra.mxu0 %v176
    %220 = vmatprep.subr.mxu0 0.0
    %221 = vmatpush1.msra.mxu0 %v175
    %222 = vmatprep.subr.mxu0 0.0
    %223 = vmatpush1.msra.mxu0 %v174
    %224 = vmatprep.subr.mxu0 0.0
    %225 = vmatpush1.msra.mxu0 %v173
    %226 = vmatprep.subr.mxu0 0.0
    %227 = vmatpush1.msra.mxu0 %v172
    %228 = vmatprep.subr.mxu0 0.0
    %229 = vmatpush1.msra.mxu0 %v171
    %230 = vmatprep.subr.mxu0 0.0
    %231 = vmatpush1.msra.mxu0 %v170
    %232 = vmatprep.subr.mxu0 0.0
    %233 = vmatpush1.msra.mxu0 %v169
    %234 = vmatprep.subr.mxu0 0.0
    %235 = vmatpush1.msra.mxu0 %v168
    %236 = vmatprep.subr.mxu0 0.0
    %237 = vmatpush1.msra.mxu0 %v167
    %238 = vmatprep.subr.mxu0 0.0
    %239 = vmatpush2.msra.mxu0 %v198
    %240 = vmatprep.subr.mxu0 0.0
    %241 = vmatpush2.msra.mxu0 %v197
    %242 = vmatprep.subr.mxu0 0.0
    %243 = vmatpush2.msra.mxu0 %v196
    %244 = vmatprep.subr.mxu0 0.0
    %245 = vmatpush2.msra.mxu0 %v195
    %246 = vmatprep.subr.mxu0 0.0
    %247 = vmatpush2.msra.mxu0 %v194
    %248 = vmatprep.subr.mxu0 0.0
    %249 = vmatpush2.msra.mxu0 %v193
    %250 = vmatprep.subr.mxu0 0.0
    %251 = vmatpush2.msra.mxu0 %v192
    %252 = vmatprep.subr.mxu0 0.0
    %253 = vmatpush2.msra.mxu0 %v191
    %254 = vmatprep.subr.mxu0 0.0
    %255 = vmatpush2.msra.mxu0 %v190
    %256 = vmatprep.subr.mxu0 0.0
    %257 = vmatpush2.msra.mxu0 %v189
    %258 = vmatprep.subr.mxu0 0.0
    %259 = vmatpush2.msra.mxu0 %v188
    %260 = vmatprep.subr.mxu0 0.0
    %261 = vmatpush2.msra.mxu0 %v187
    %262 = vmatprep.subr.mxu0 0.0
    %263 = vmatpush2.msra.mxu0 %v186
    %264 = vmatprep.subr.mxu0 0.0
    %265 = vmatpush2.msra.mxu0 %v185
    %266 = vmatprep.subr.mxu0 0.0
    %267 = vmatpush2.msra.mxu0 %v184
    %268 = vmatprep.subr.mxu0 0.0
    %269 = vmatpush2.msra.mxu0 %v183
    %270 = vmatprep.mubr.f32.mxu0 %v166
    %271 = vmatmul.mubr.f32.gmra.mxu0 %v165
    %v272 = vpop.f32.mrf.mxu0
    %v273 = vadd.f32 %v204, %v272
    %v274 = vpop.f32.mrf.mxu0
    %275 = vdwg.mxu0
    %vm276 = vcmask 7168
    %v277 = vsel %vm276, %v273, -inf
    %v278 = vrot.slane %v277, 4
    %v279 = vmax.f32 %v277, %v278
    %v280 = vrot.slane %v279, 2
    %v281 = vmax.f32 %v279, %v280
    %v282 = vrot.slane %v281, 1
    %v283 = vmax.f32 %v281, %v282
    %v284 = vsub.f32 %v273, %v283
    %v285 = vmul.f32 %v284, 1.442695
    %v286 = vpow.pop %v285
    %v287 = vsel %vm276, %v286, 0.0
    %v288 = vrot.slane %v287, 4
    %v289 = vadd.f32 %v287, %v288
    %v290 = vrot.slane %v289, 2
    %v291 = vadd.f32 %v289, %v290
    %v292 = vrot.slane %v291, 1
    %v293 = vadd.f32 %v291, %v292
    %v294 = vrcp.pop %v293
    %v295 = vmul.f32 %v286, %v294
    %297 = vset.pattern.permute.xlu0 0
    %298 = vperm.xlu0 %297, %v295
    %v299 = vpop.permute.xlu0 %298
    %v301 = vmul.f32 %v299, %v47
    %v302 = vrot.slane %v301, 4
    %v303 = vadd.f32 %v301, %v302
    %v304 = vrot.slane %v303, 2
    %v305 = vadd.f32 %v303, %v304
    %v306 = vrot.slane %v305, 1
    %v307 = vadd.f32 %v305, %v306
    %v308 = vld [vmem:[%s5] sm:$0xff]
    %v309 = vld [vmem:[%s5 + $0x8] sm:$0xff]
    %v310 = vld [vmem:[%s5 + $0x10] sm:$0xff]
    %v311 = vld [vmem:[%s5 + $0x18] sm:$0xff]
    %v312 = vld [vmem:[%s5 + $0x20] sm:$0xff]
    %v313 = vld [vmem:[%s5 + $0x28] sm:$0xff]
    %v314 = vld [vmem:[%s5 + $0x30] sm:$0xff]
    %v315 = vld [vmem:[%s5 + $0x38] sm:$0xff]
    %v316 = vld [vmem:[%s5 + $0x40] sm:$0xff]
    %v317 = vld [vmem:[%s5 + $0x48] sm:$0xff]
    %v318 = vld [vmem:[%s5 + $0x50] sm:$0xff]
    %v319 = vld [vmem:[%s5 + $0x58] sm:$0xff]
    %v320 = vld [vmem:[%s5 + $0x60] sm:$0xff]
    %v321 = vld [vmem:[%s5 + $0x68] sm:$0xff]
    %v322 = vld [vmem:[%s5 + $0x70] sm:$0xff]
    %v323 = vld [vmem:[%s5 + $0x78] sm:$0xff]
    %v324 = vld [vmem:[%s5 + $0x80] sm:$0xff]
    %v325 = vld [vmem:[%s5 + $0x88] sm:$0xff]
    %v326 = vld [vmem:[%s5 + $0x90] sm:$0xff]
    %v327 = vld [vmem:[%s5 + $0x98] sm:$0xff]
    %v328 = vld [vmem:[%s5 + $0xa0] sm:$0xff]
    %v329 = vld [vmem:[%s5 + $0xa8] sm:$0xff]
    %v330 = vld [vmem:[%s5 + $0xb0] sm:$0xff]
    %v331 = vld [vmem:[%s5 + $0xb8] sm:$0xff]
    %v332 = vld [vmem:[%s5 + $0xc0] sm:$0xff]
    %v333 = vld [vmem:[%s5 + $0xc8] sm:$0xff]
    %v334 = vld [vmem:[%s5 + $0xd0] sm:$0xff]
    %v335 = vld [vmem:[%s5 + $0xd8] sm:$0xff]
    %v336 = vld [vmem:[%s5 + $0xe0] sm:$0xff]
    %v337 = vld [vmem:[%s5 + $0xe8] sm:$0xff]
    %v338 = vld [vmem:[%s5 + $0xf0] sm:$0xff]
    %v339 = vld [vmem:[%s5 + $0xf8] sm:$0xff]
    %v340 = vld [vmem:[%s6] sm:$0x3]
    %v342 = vlaneseq
    %v343 = vshrl.u32 %v342, 7
    %v344 = vsub.s32 0, %v343
    %v345 = vrot.slane %v340, %v344
    %v346 = vlaneseq
    %v347 = vshrl.u32 %v346, 7
    %v348 = vsub.s32 1, %v347
    %v349 = vrot.slane %v340, %v348
    %352 = vmatprep.subr.mxu0 %v339
    %353 = vmatpush1.msra.mxu0 %v338
    %354 = vmatprep.subr.mxu0 %v337
    %355 = vmatpush1.msra.mxu0 %v336
    %356 = vmatprep.subr.mxu0 %v335
    %357 = vmatpush1.msra.mxu0 %v334
    %358 = vmatprep.subr.mxu0 %v333
    %359 = vmatpush1.msra.mxu0 %v332
    %360 = vmatprep.subr.mxu0 %v331
    %361 = vmatpush1.msra.mxu0 %v330
    %362 = vmatprep.subr.mxu0 %v329
    %363 = vmatpush1.msra.mxu0 %v328
    %364 = vmatprep.subr.mxu0 %v327
    %365 = vmatpush1.msra.mxu0 %v326
    %366 = vmatprep.subr.mxu0 %v325
    %367 = vmatpush1.msra.mxu0 %v324
    %368 = vmatprep.subr.mxu0 %v323
    %369 = vmatpush1.msra.mxu0 %v322
    %370 = vmatprep.subr.mxu0 %v321
    %371 = vmatpush1.msra.mxu0 %v320
    %372 = vmatprep.subr.mxu0 %v319
    %373 = vmatpush1.msra.mxu0 %v318
    %374 = vmatprep.subr.mxu0 %v317
    %375 = vmatpush1.msra.mxu0 %v316
    %376 = vmatprep.subr.mxu0 %v315
    %377 = vmatpush1.msra.mxu0 %v314
    %378 = vmatprep.subr.mxu0 %v313
    %379 = vmatpush1.msra.mxu0 %v312
    %380 = vmatprep.subr.mxu0 %v311
    %381 = vmatpush1.msra.mxu0 %v310
    %382 = vmatprep.subr.mxu0 %v309
    %383 = vmatpush1.msra.mxu0 %v308
    %384 = vmatprep.subr.mxu0 0.0
    %385 = vmatpush2.msra.mxu0 0.0
    %386 = vmatprep.subr.mxu0 0.0
    %387 = vmatpush2.msra.mxu0 0.0
    %388 = vmatprep.subr.mxu0 0.0
    %389 = vmatpush2.msra.mxu0 0.0
    %390 = vmatprep.subr.mxu0 0.0
    %391 = vmatpush2.msra.mxu0 0.0
    %392 = vmatprep.subr.mxu0 0.0
    %393 = vmatpush2.msra.mxu0 0.0
    %394 = vmatprep.subr.mxu0 0.0
    %395 = vmatpush2.msra.mxu0 0.0
    %396 = vmatprep.subr.mxu0 0.0
    %397 = vmatpush2.msra.mxu0 0.0
    %398 = vmatprep.subr.mxu0 0.0
    %399 = vmatpush2.msra.mxu0 0.0
    %400 = vmatprep.subr.mxu0 0.0
    %401 = vmatpush2.msra.mxu0 0.0
    %402 = vmatprep.subr.mxu0 0.0
    %403 = vmatpush2.msra.mxu0 0.0
    %404 = vmatprep.subr.mxu0 0.0
    %405 = vmatpush2.msra.mxu0 0.0
    %406 = vmatprep.subr.mxu0 0.0
    %407 = vmatpush2.msra.mxu0 0.0
    %408 = vmatprep.subr.mxu0 0.0
    %409 = vmatpush2.msra.mxu0 0.0
    %410 = vmatprep.subr.mxu0 0.0
    %411 = vmatpush2.msra.mxu0 0.0
    %412 = vmatprep.subr.mxu0 0.0
    %413 = vmatpush2.msra.mxu0 0.0
    %414 = vmatprep.subr.mxu0 0.0
    %415 = vmatpush2.msra.mxu0 0.0
    %416 = vmatprep.mubr.f32.mxu0 0.0
    %417 = vmatmul.mubr.f32.gmra.mxu0 %v307
    %v418 = vpop.f32.mrf.mxu0
    %v419 = vadd.f32 %v345, %v418
    %v420 = vpop.f32.mrf.mxu0
    %v421 = vadd.f32 %v349, %v420
    %422 = vdwg.mxu0
    %v423 = vmax.f32 %v419, 0.0
    %v424 = vmax.f32 %v421, 0.0
    %v425 = vld [vmem:[%s7] sm:$0xff]
    %v426 = vld [vmem:[%s7 + $0x8] sm:$0xff]
    %v427 = vld [vmem:[%s7 + $0x10] sm:$0xff]
    %v428 = vld [vmem:[%s7 + $0x18] sm:$0xff]
    %v429 = vld [vmem:[%s7 + $0x20] sm:$0xff]
    %v430 = vld [vmem:[%s7 + $0x28] sm:$0xff]
    %v431 = vld [vmem:[%s7 + $0x30] sm:$0xff]
    %v432 = vld [vmem:[%s7 + $0x38] sm:$0xff]
    %v433 = vld [vmem:[%s7 + $0x40] sm:$0xff]
    %v434 = vld [vmem:[%s7 + $0x48] sm:$0xff]
    %v435 = vld [vmem:[%s7 + $0x50] sm:$0xff]
    %v436 = vld [vmem:[%s7 + $0x58] sm:$0xff]
    %v437 = vld [vmem:[%s7 + $0x60] sm:$0xff]
    %v438 = vld [vmem:[%s7 + $0x68] sm:$0xff]
    %v439 = vld [vmem:[%s7 + $0x70] sm:$0xff]
    %v440 = vld [vmem:[%s7 + $0x78] sm:$0xff]
    %v441 = vld [vmem:[%s7 + $0x80] sm:$0xff]
    %v442 = vld [vmem:[%s7 + $0x88] sm:$0xff]
    %v443 = vld [vmem:[%s7 + $0x90] sm:$0xff]
    %v444 = vld [vmem:[%s7 + $0x98] sm:$0xff]
    %v445 = vld [vmem:[%s7 + $0xa0] sm:$0xff]
    %v446 = vld [vmem:[%s7 + $0xa8] sm:$0xff]
    %v447 = vld [vmem:[%s7 + $0xb0] sm:$0xff]
    %v448 = vld [vmem:[%s7 + $0xb8] sm:$0xff]
    %v449 = vld [vmem:[%s7 + $0xc0] sm:$0xff]
    %v450 = vld [vmem:[%s7 + $0xc8] sm:$0xff]
    %v451 = vld [vmem:[%s7 + $0xd0] sm:$0xff]
    %v452 = vld [vmem:[%s7 + $0xd8] sm:$0xff]
    %v453 = vld [vmem:[%s7 + $0xe0] sm:$0xff]
    %v454 = vld [vmem:[%s7 + $0xe8] sm:$0xff]
    %v455 = vld [vmem:[%s7 + $0xf0] sm:$0xff]
    %v456 = vld [vmem:[%s7 + $0xf8] sm:$0xff]
    %v457 = vld [vmem:[%s8] sm:$0x1]
    %458 = vmatprep.subr.mxu0 0.0
    %459 = vmatpush1.msra.mxu0 %v440
    %460 = vmatprep.subr.mxu0 0.0
    %461 = vmatpush1.msra.mxu0 %v439
    %462 = vmatprep.subr.mxu0 0.0
    %463 = vmatpush1.msra.mxu0 %v438
    %464 = vmatprep.subr.mxu0 0.0
    %465 = vmatpush1.msra.mxu0 %v437
    %466 = vmatprep.subr.mxu0 0.0
    %467 = vmatpush1.msra.mxu0 %v436
    %468 = vmatprep.subr.mxu0 0.0
    %469 = vmatpush1.msra.mxu0 %v435
    %470 = vmatprep.subr.mxu0 0.0
    %471 = vmatpush1.msra.mxu0 %v434
    %472 = vmatprep.subr.mxu0 0.0
    %473 = vmatpush1.msra.mxu0 %v433
    %474 = vmatprep.subr.mxu0 0.0
    %475 = vmatpush1.msra.mxu0 %v432
    %476 = vmatprep.subr.mxu0 0.0
    %477 = vmatpush1.msra.mxu0 %v431
    %478 = vmatprep.subr.mxu0 0.0
    %479 = vmatpush1.msra.mxu0 %v430
    %480 = vmatprep.subr.mxu0 0.0
    %481 = vmatpush1.msra.mxu0 %v429
    %482 = vmatprep.subr.mxu0 0.0
    %483 = vmatpush1.msra.mxu0 %v428
    %484 = vmatprep.subr.mxu0 0.0
    %485 = vmatpush1.msra.mxu0 %v427
    %486 = vmatprep.subr.mxu0 0.0
    %487 = vmatpush1.msra.mxu0 %v426
    %488 = vmatprep.subr.mxu0 0.0
    %489 = vmatpush1.msra.mxu0 %v425
    %490 = vmatprep.subr.mxu0 0.0
    %491 = vmatpush2.msra.mxu0 %v456
    %492 = vmatprep.subr.mxu0 0.0
    %493 = vmatpush2.msra.mxu0 %v455
    %494 = vmatprep.subr.mxu0 0.0
    %495 = vmatpush2.msra.mxu0 %v454
    %496 = vmatprep.subr.mxu0 0.0
    %497 = vmatpush2.msra.mxu0 %v453
    %498 = vmatprep.subr.mxu0 0.0
    %499 = vmatpush2.msra.mxu0 %v452
    %500 = vmatprep.subr.mxu0 0.0
    %501 = vmatpush2.msra.mxu0 %v451
    %502 = vmatprep.subr.mxu0 0.0
    %503 = vmatpush2.msra.mxu0 %v450
    %504 = vmatprep.subr.mxu0 0.0
    %505 = vmatpush2.msra.mxu0 %v449
    %506 = vmatprep.subr.mxu0 0.0
    %507 = vmatpush2.msra.mxu0 %v448
    %508 = vmatprep.subr.mxu0 0.0
    %509 = vmatpush2.msra.mxu0 %v447
    %510 = vmatprep.subr.mxu0 0.0
    %511 = vmatpush2.msra.mxu0 %v446
    %512 = vmatprep.subr.mxu0 0.0
    %513 = vmatpush2.msra.mxu0 %v445
    %514 = vmatprep.subr.mxu0 0.0
    %515 = vmatpush2.msra.mxu0 %v444
    %516 = vmatprep.subr.mxu0 0.0
    %517 = vmatpush2.msra.mxu0 %v443
    %518 = vmatprep.subr.mxu0 0.0
    %519 = vmatpush2.msra.mxu0 %v442
    %520 = vmatprep.subr.mxu0 0.0
    %521 = vmatpush2.msra.mxu0 %v441
    %522 = vmatprep.mubr.f32.mxu0 %v424
    %523 = vmatmul.mubr.f32.gmra.mxu0 %v423
    %v524 = vpop.f32.mrf.mxu0
    %v525 = vadd.f32 %v457, %v524
    %v526 = vpop.f32.mrf.mxu0
    %527 = vdwg.mxu0
    %v528 = vsub.f32 0.0, %v525
    %v529 = vmul.f32 %v528, 1.442695
    %v530 = vpow.pop %v529
    %v531 = vadd.f32 %v530, 1.0
    %v532 = vrcp.pop %v531
    %v533 = vmul.f32 1.0, %v532
    %vm534 = vcmask 253952
    %535 = vst.msk [vmem:[#allocation6] sm:$0x1] %vm534, %v533
    // Predicated region
    $region42: #{tpu_custom_call.1} parent=1 // pred_check
      _
    $region43: #{tpu_custom_call.1} parent=1 // pred_check_branch
      %537 = sbr.rel (0) target = $region45
    $region44: #{tpu_custom_call.1} parent=1 // pred_region
      %s539 = ssub.s32 16, 16
      %540 = vsyncadd [#allocation5], %s539
      %s542 = sshll.u32 [#allocation6], 4
      %s543 = int_to_ptr.vmem [resolvable:$true] %s542
      %545 = dma.vmem_to_hbm [thread:$0]  %s543, 16, %s9, [#allocation5]
    $region45: #{tpu_custom_call.1} parent=1 // pred_fallthru
      _
    // Predicated region
    $region46: #{tpu_custom_call.1} parent=1 // pred_check
      _
    $region47: #{tpu_custom_call.1} parent=1 // pred_check_branch
      %547 = sbr.rel (0) target = $region49
    $region48: #{tpu_custom_call.1} parent=1 // pred_region
      %548 = dma.done [#allocation5], 16
    $region49: #{tpu_custom_call.1} parent=1 // pred_fallthru
      _
    %549 = vsyncpa [#allocation4], 1
    %550 = vsyncpa [#allocation5], 1

</llo_original>
